<compile_context>
chip_gen: v7x
topology: tpu7x:2x2x1
jax: 0.10.0
libtpu: 0.0.40
codegen_flags: <defaults>
</compile_context>

<pallas_src>
import jax
import jax.numpy as jnp
from jax.experimental import pallas as pl
from jax.experimental.pallas import tpu as pltpu

BN_EPS = 1e-5


def _round_up(x, m):
    return (x + m - 1) // m * m


def _head_kernel(x_ref, w1_ref, b1_ref, w2_ref, b2_ref, o_ref, acc_ref):
    """Fused Head forward. BN1/BN2 are pre-folded into w1/b1 and w2/b2.

    Grid axis 0 tiles the in_f (K) reduction of the first matmul.
    """
    k = pl.program_id(0)

    @pl.when(k == 0)
    def _():
        acc_ref[...] = jnp.zeros_like(acc_ref)

    # Linear(in_f, 512): K-tiled MXU matmul, f32 accumulation.
    acc_ref[...] += jnp.dot(x_ref[...], w1_ref[...],
                            preferred_element_type=jnp.float32)

    @pl.when(k == pl.num_programs(0) - 1)
    def _():
        # Bias (BN1 folded in) + ReLU.  Dropout is identity in eval mode.
        # TODO(synk): training-mode dropout / batch-stats BN not emitted.
        h = jnp.maximum(acc_ref[...] + b1_ref[...], 0.0)            # [B, 512] f32
        # Linear(512, 1) with BN2 folded in, as VPU multiply + lane reduction
        # (avoids an N=1 MXU matmul that uses 1/256 of the MXU columns).
        out = jnp.sum(h * w2_ref[...], axis=-1, keepdims=True) + b2_ref[...]
        o_ref[...] = out.astype(o_ref.dtype)                         # [B, 1]


def fold_head_params(params, eps=BN_EPS):
    """Fold the two eval-mode BatchNorm1d layers into the Linear weights/biases."""
    scale1 = params["bn1_gamma"] * jax.lax.rsqrt(params["bn1_var"] + eps)   # [1, in_f]
    shift1 = params["bn1_beta"] - params["bn1_mean"] * scale1               # [1, in_f]
    w1f = params["w1"] * scale1.reshape(-1, 1)                              # [in_f, 512]
    b1f = params["b1"] + shift1 @ params["w1"]                              # [1, 512]

    scale2 = params["bn2_gamma"] * jax.lax.rsqrt(params["bn2_var"] + eps)   # [1, 512]
    shift2 = params["bn2_beta"] - params["bn2_mean"] * scale2               # [1, 512]
    w2f = params["w2"].reshape(1, -1) * scale2                              # [1, 512] row
    b2f = params["b2"] + shift2 @ params["w2"]                              # [1, 1]
    return w1f, b1f, w2f, b2f


def fcn_forward(x_nchw, params, *, tile_k=512, weights_dtype=jnp.float32):
    """FCN forward: base (identity) -> Head, Head fused in one Pallas kernel."""
    B = x_nchw.shape[0]
    # base(x): identity feature extractor (original code injects densenet169).
    # TODO(synk): the `base` backbone is an external module argument, not part of FCN.
    feats = x_nchw
    x_flat = feats.reshape(B, -1).astype(jnp.float32)                 # nn.Flatten()
    in_f = x_flat.shape[1]
    hidden = params["w1"].shape[1]

    # Fold BN into the Linears once, outside the kernel, on static params.
    w1f, b1f, w2f, b2f = fold_head_params(params)

    # Pad batch to a sublane multiple (full vreg rows, unmasked stores) and
    # in_f to a tile_k multiple (zero rows/cols contribute nothing to the dot).
    B_pad = max(8, _round_up(B, 8))
    tile_k = min(tile_k, _round_up(in_f, 128))
    in_f_pad = _round_up(in_f, tile_k)
    k_tiles = in_f_pad // tile_k

    x_p = jnp.zeros((B_pad, in_f_pad), jnp.float32).at[:B, :in_f].set(x_flat)
    w1_p = jnp.zeros((in_f_pad, hidden), jnp.float32).at[:in_f, :].set(w1f)

    # Stream the big operands in reduced precision if requested; f32 accumulate.
    x_p = x_p.astype(weights_dtype)
    w1_p = w1_p.astype(weights_dtype)

    dsize = jnp.dtype(weights_dtype).itemsize
    cost = pl.CostEstimate(
        flops=2 * B_pad * in_f_pad * hidden + 3 * B_pad * hidden,
        transcendentals=0,
        bytes_accessed=(x_p.size + w1_p.size) * dsize
        + (b1f.size + w2f.size + b2f.size + B_pad) * 4,
    )

    out = pl.pallas_call(
        _head_kernel,
        out_shape=jax.ShapeDtypeStruct((B_pad, 1), jnp.float32),
        grid_spec=pltpu.PrefetchScalarGridSpec(
            num_scalar_prefetch=0,
            grid=(k_tiles,),
            in_specs=[
                pl.BlockSpec((B_pad, tile_k), lambda k: (0, k)),    # x       (K-tiled)
                pl.BlockSpec((tile_k, hidden), lambda k: (k, 0)),   # w1 fold (K-tiled)
                pl.BlockSpec((1, hidden), lambda k: (0, 0)),        # b1 fold (resident)
                pl.BlockSpec((1, hidden), lambda k: (0, 0)),        # w2 fold (resident)
                pl.BlockSpec((1, 1), lambda k: (0, 0)),             # b2 fold (resident)
            ],
            out_specs=pl.BlockSpec((B_pad, 1), lambda k: (0, 0)),
            scratch_shapes=[pltpu.VMEM((B_pad, hidden), jnp.float32)],
        ),
        compiler_params=pltpu.CompilerParams(
            dimension_semantics=("arbitrary",),     # K is a reduction axis
            vmem_limit_bytes=32 * 1024 * 1024,      # safe on v5e/v6e/v7x
        ),
        cost_estimate=cost,
    )(x_p, w1_p, b1f, w2f, b2f)

    return out[:B, :]


def init_params(key, in_f, hidden=512, out_f=1):
    """Deterministic synthetic parameter init (shapes match Head.__init__)."""
    k1, k2, k3, k4 = jax.random.split(key, 4)
    return {
        # BatchNorm1d(in_f)
        "bn1_gamma": jnp.ones((1, in_f), jnp.float32),
        "bn1_beta": jnp.zeros((1, in_f), jnp.float32),
        "bn1_mean": 0.01 * jax.random.normal(k1, (1, in_f), jnp.float32),
        "bn1_var": jnp.ones((1, in_f), jnp.float32),
        # Linear(in_f, 512)  (stored transposed: [in_f, 512])
        "w1": 0.02 * jax.random.normal(k2, (in_f, hidden), jnp.float32),
        "b1": 0.01 * jnp.ones((1, hidden), jnp.float32),
        # BatchNorm1d(512)
        "bn2_gamma": jnp.ones((1, hidden), jnp.float32),
        "bn2_beta": jnp.zeros((1, hidden), jnp.float32),
        "bn2_mean": 0.01 * jax.random.normal(k3, (1, hidden), jnp.float32),
        "bn2_var": jnp.ones((1, hidden), jnp.float32),
        # Linear(512, out_f)  (stored transposed: [512, out_f])
        "w2": 0.02 * jax.random.normal(k4, (hidden, out_f), jnp.float32),
        "b2": 0.01 * jnp.ones((1, out_f), jnp.float32),
    }


def _reference(x_nchw, params):
    """Pure-JAX reference of the same forward (unfolded BN), for sanity check."""
    B = x_nchw.shape[0]
    x = x_nchw.reshape(B, -1).astype(jnp.float32)
    x = (x - params["bn1_mean"]) * jax.lax.rsqrt(params["bn1_var"] + BN_EPS) \
        * params["bn1_gamma"] + params["bn1_beta"]
    h = x @ params["w1"] + params["b1"]
    h = jnp.maximum(h, 0.0)
    h = (h - params["bn2_mean"]) * jax.lax.rsqrt(params["bn2_var"] + BN_EPS) \
        * params["bn2_gamma"] + params["bn2_beta"]
    return h @ params["w2"] + params["b2"]


if __name__ == "__main__":
    key = jax.random.PRNGKey(0)
    kx, kp = jax.random.split(key)

    B, C, H, W = 2, 4, 16, 16            # small synthetic shapes
    in_f = C * H * W                     # 1024 features after base(identity)+flatten

    x = jax.random.normal(kx, (B, C, H, W), jnp.float32)
    params = init_params(kp, in_f)

    ref = _reference(x, params)

    # f32 streaming path (tight check, validates the BN fold + K-tiling).
    out_f32 = jax.block_until_ready(fcn_forward(x, params, weights_dtype=jnp.float32))
    assert out_f32.shape == (B, 1), out_f32.shape
    assert jnp.allclose(out_f32, ref, atol=1e-4, rtol=1e-4), (out_f32, ref)

    # bf16 streaming path (HBM-bound regime; MXU bf16-native), loose check.
    out_bf16 = jax.block_until_ready(fcn_forward(x, params, weights_dtype=jnp.bfloat16))
    assert out_bf16.shape == (B, 1), out_bf16.shape
    assert jnp.allclose(out_bf16, ref, atol=5e-2, rtol=5e-2), (out_bf16, ref)

    print("KERNEL_OK")
</pallas_src>

<mosaic_0001>
module attributes {stable_mosaic.version = 11 : i64} {
  func.func @_head_kernel(%arg0: i32, %arg1: memref<8x512xf32, #tpu.memory_space<vmem>>, %arg2: memref<512x512xf32, #tpu.memory_space<vmem>>, %arg3: memref<1x512xf32, #tpu.memory_space<vmem>>, %arg4: memref<1x512xf32, #tpu.memory_space<vmem>>, %arg5: memref<1x1xf32, #tpu.memory_space<vmem>>, %arg6: memref<8x1xf32, #tpu.memory_space<vmem>>, %arg7: memref<8x512xf32, #tpu.memory_space<vmem>>) attributes {dimension_semantics = [#tpu.dimension_semantics<arbitrary>], iteration_bounds = array<i64: 2>, scalar_prefetch = 0 : i64, scratch_operands = 1 : i64, tpu.core_type = #tpu.core_type<tc>, window_params = [{transform_indices = @transform_0, window_bounds = array<i64: 8, 512>}, {transform_indices = @transform_1, window_bounds = array<i64: 512, 512>}, {pipeline_mode = #tpu.pipeline_mode<synchronous>, transform_indices = @transform_2, window_bounds = array<i64: 1, 512>}, {pipeline_mode = #tpu.pipeline_mode<synchronous>, transform_indices = @transform_3, window_bounds = array<i64: 1, 512>}, {pipeline_mode = #tpu.pipeline_mode<synchronous>, transform_indices = @transform_4, window_bounds = array<i64: 1, 1>}, {pipeline_mode = #tpu.pipeline_mode<synchronous>, transform_indices = @transform_5, window_bounds = array<i64: 8, 1>}]} {
    %c0_i32 = arith.constant 0 : i32
    %0 = arith.cmpi eq, %arg0, %c0_i32 : i32
    %1 = arith.extui %0 : i1 to i32
    %c0_i32_0 = arith.constant 0 : i32
    %2 = arith.cmpi ne, %1, %c0_i32_0 : i32
    scf.if %2 {
      %cst_9 = arith.constant 0.000000e+00 : f32
      %12 = vector.broadcast %cst_9 : f32 to vector<8x512xf32>
      %c0_10 = arith.constant 0 : index
      %c0_11 = arith.constant 0 : index
      %13 = vector.load %arg7[%c0_10, %c0_11] : memref<8x512xf32, #tpu.memory_space<vmem>>, vector<8x512xf32>
      tpu.vector_store %arg7[%c0_10, %c0_11], %12 {strides = array<i32>} : memref<8x512xf32, #tpu.memory_space<vmem>>, vector<8x512xf32>,
    } else {
    }
    %c0 = arith.constant 0 : index
    %c0_1 = arith.constant 0 : index
    %3 = vector.load %arg7[%c0, %c0_1] : memref<8x512xf32, #tpu.memory_space<vmem>>, vector<8x512xf32>
    %c0_2 = arith.constant 0 : index
    %c0_3 = arith.constant 0 : index
    %4 = vector.load %arg1[%c0_2, %c0_3] : memref<8x512xf32, #tpu.memory_space<vmem>>, vector<8x512xf32>
    %c0_4 = arith.constant 0 : index
    %c0_5 = arith.constant 0 : index
    %5 = vector.load %arg2[%c0_4, %c0_5] : memref<512x512xf32, #tpu.memory_space<vmem>>, vector<512x512xf32>
    %cst = arith.constant dense<0.000000e+00> : vector<8x512xf32>
    %6 = tpu.matmul %4, %5, %cst {dimension_numbers = #tpu.dot_dimension_numbers<[1], [0], [0], [1], [0, 0, 1, 1], [], []>} : vector<8x512xf32>, vector<512x512xf32>, vector<8x512xf32> -> vector<8x512xf32>
    %7 = arith.addf %3, %6 : vector<8x512xf32>
    %c0_6 = arith.constant 0 : index
    %c0_7 = arith.constant 0 : index
    %8 = vector.load %arg7[%c0_6, %c0_7] : memref<8x512xf32, #tpu.memory_space<vmem>>, vector<8x512xf32>
    tpu.vector_store %arg7[%c0_6, %c0_7], %7 {strides = array<i32>} : memref<8x512xf32, #tpu.memory_space<vmem>>, vector<8x512xf32>,
    %c1_i32 = arith.constant 1 : i32
    %9 = arith.cmpi eq, %arg0, %c1_i32 : i32
    %10 = arith.extui %9 : i1 to i32
    %c0_i32_8 = arith.constant 0 : i32
    %11 = arith.cmpi ne, %10, %c0_i32_8 : i32
    scf.if %11 {
      %c0_9 = arith.constant 0 : index
      %c0_10 = arith.constant 0 : index
      %12 = vector.load %arg7[%c0_9, %c0_10] : memref<8x512xf32, #tpu.memory_space<vmem>>, vector<8x512xf32>
      %c0_11 = arith.constant 0 : index
      %c0_12 = arith.constant 0 : index
      %13 = vector.load %arg3[%c0_11, %c0_12] : memref<1x512xf32, #tpu.memory_space<vmem>>, vector<1x512xf32>
      %14 = vector.broadcast %13 : vector<1x512xf32> to vector<8x512xf32>
      %15 = arith.addf %12, %14 : vector<8x512xf32>
      %cst_13 = arith.constant 0.000000e+00 : f32
      %16 = vector.broadcast %cst_13 : f32 to vector<8x512xf32>
      %17 = arith.maximumf %15, %16 : vector<8x512xf32>
      %c0_14 = arith.constant 0 : index
      %c0_15 = arith.constant 0 : index
      %18 = vector.load %arg4[%c0_14, %c0_15] : memref<1x512xf32, #tpu.memory_space<vmem>>, vector<1x512xf32>
      %19 = vector.broadcast %18 : vector<1x512xf32> to vector<8x512xf32>
      %20 = arith.mulf %17, %19 : vector<8x512xf32>
      %cst_16 = arith.constant dense<0.000000e+00> : vector<8xf32>
      %21 = vector.multi_reduction <add>, %20, %cst_16 [1] : vector<8x512xf32> to vector<8xf32>
      %22 = vector.shape_cast %21 : vector<8xf32> to vector<8x1xf32>
      %c0_17 = arith.constant 0 : index
      %c0_18 = arith.constant 0 : index
      %23 = vector.load %arg5[%c0_17, %c0_18] : memref<1x1xf32, #tpu.memory_space<vmem>>, vector<1x1xf32>
      %24 = vector.broadcast %23 : vector<1x1xf32> to vector<8x1xf32>
      %25 = arith.addf %22, %24 : vector<8x1xf32>
      %c0_19 = arith.constant 0 : index
      %c0_20 = arith.constant 0 : index
      %26 = vector.load %arg6[%c0_19, %c0_20] : memref<8x1xf32, #tpu.memory_space<vmem>>, vector<8x1xf32>
      tpu.vector_store %arg6[%c0_19, %c0_20], %25 {strides = array<i32>} : memref<8x1xf32, #tpu.memory_space<vmem>>, vector<8x1xf32>,
    } else {
    }
    return
  }
  func.func @transform_0(%arg0: i32) -> (i32, i32) {
    %c0_i32 = arith.constant 0 : i32
    %c0_i32_0 = arith.constant 0 : i32
    return %c0_i32, %arg0 : i32, i32
  }
  func.func @transform_1(%arg0: i32) -> (i32, i32) {
    %c0_i32 = arith.constant 0 : i32
    %c0_i32_0 = arith.constant 0 : i32
    return %arg0, %c0_i32 : i32, i32
  }
  func.func @transform_2(%arg0: i32) -> (i32, i32) {
    %c0_i32 = arith.constant 0 : i32
    %c0_i32_0 = arith.constant 0 : i32
    %c0_i32_1 = arith.constant 0 : i32
    return %c0_i32, %c0_i32_0 : i32, i32
  }
  func.func @transform_3(%arg0: i32) -> (i32, i32) {
    %c0_i32 = arith.constant 0 : i32
    %c0_i32_0 = arith.constant 0 : i32
    %c0_i32_1 = arith.constant 0 : i32
    return %c0_i32, %c0_i32_0 : i32, i32
  }
  func.func @transform_4(%arg0: i32) -> (i32, i32) {
    %c0_i32 = arith.constant 0 : i32
    %c0_i32_0 = arith.constant 0 : i32
    %c0_i32_1 = arith.constant 0 : i32
    return %c0_i32, %c0_i32_0 : i32, i32
  }
  func.func @transform_5(%arg0: i32) -> (i32, i32) {
    %c0_i32 = arith.constant 0 : i32
    %c0_i32_0 = arith.constant 0 : i32
    %c0_i32_1 = arith.constant 0 : i32
    return %c0_i32, %c0_i32_0 : i32, i32
  }
}

</mosaic_0001>

<llo_original>
// kernel: tpu_custom_call.1
$region0: #{tpu_custom_call.1}
  #allocation0 [shape = 'u32[]', space=smem, size = 0x4, offset = 0x4, fixed_abs, tag = 'smem constant byte address 0x4 - core index']
  #allocation1 [shape = 'u32[144,128]{1,0:T(1,128)}', space=vmem, size = 0x12000, scoped, tag = 'internal scratch']
  #allocation2 [shape = 'f32[8,512]{1,0:T(8,128)}', space=vmem, size = 0x4000, scoped, tag = 'scratch operand']
  #allocation3 [shape = 'f32[1,1]{1,0:T(1,128)S(1)}', space=vmem, size = 0x200, scoped, tag = 'scoped memory for tpu_custom_call.1']
  %s0 = inlined_call_operand.hbm [shape: f32[8,1024], index: 0, kind: input, shape index: {}]
  %s1 = inlined_call_operand.hbm [shape: f32[1024,512], index: 1, kind: input, shape index: {}]
  %s2 = inlined_call_operand.hbm [shape: f32[1,512], index: 2, kind: input, shape index: {}]
  %s3 = inlined_call_operand.hbm [shape: f32[1,512], index: 3, kind: input, shape index: {}]
  %s4 = inlined_call_operand.<no memory space> [shape: f32[1,1], index: 4, kind: input, shape index: {}]
  %s5 = inlined_call_operand.vmem [shape: f32[8,1], index: 5, kind: output, shape index: {}]
  %s6 = sld [smem:[#allocation0]]
  $region77: #{tpu_custom_call.1} parent=0
    _
  %s8 = ssub.s32 1, %s6
  %s9 = scalar_select 0, %s8, %s6
  %v10 = vstv %s4
  %11 = vst [vmem:[#allocation3] sm:$0x1] %v10
  $region1: #{tpu_custom_call.1} parent=0
    #allocation4 [shape = 'u8[32768]{0}', space=vmem, size = 0x8000, scoped, tag = 'input window, operand 0']
    #allocation5 [shape = 's32[2]{0}', space=sflag, size = 0x8, scoped, tag = 'scoped memory for tpu_custom_call.1']
    #allocation6 [shape = 'u8[2097152]{0}', space=vmem, size = 0x200000, scoped, tag = 'input window, operand 1']
    #allocation7 [shape = 's32[2]{0}', space=sflag, size = 0x8, scoped, tag = 'scoped memory for tpu_custom_call.1']
    #allocation8 [shape = 'u8[2048]{0}', space=vmem, size = 0x800, scoped, tag = 'input window, operand 2, single buffered']
    #allocation9 [shape = 'u8[2048]{0}', space=vmem, size = 0x800, scoped, tag = 'input window, operand 3, single buffered']
    #allocation10 [shape = 's32[1]{0}', space=sflag, size = 0x4, scoped, tag = 'scoped memory for tpu_custom_call.1']
    %12 = vsyncpa [#allocation5], 0
    %s13 = scalar_lea.sflag [#allocation5], 1
    %14 = vsyncpa %s13, 0
    %15 = vsyncpa [#allocation7], 0
    %s16 = scalar_lea.sflag [#allocation7], 1
    %17 = vsyncpa %s16, 0
    %18 = vsyncpa [#allocation10], 0
    loop: start=0, step=1, limit=4
    $region2: #{tpu_custom_call.1} parent=1 // loop_pre_header
      _
    $region3: #{tpu_custom_call.1} parent=1 // loop_header
      %s20 = sphi 0, %s24
      %p21 = scmp.ge.s32.totalorder %s20, 4
      %s30 = sphi 0, %s32
      %s33 = sphi 0, %s30
      %s34 = sphi 0, %s33
      %s50 = sphi 0, %s34
      %s56 = sphi 0, %s58
      %s59 = sphi 0, %s56
      %s60 = sphi 0, %s59
      %s76 = sphi 0, %s60
      %s80 = sphi 0, %s80
      %s82 = sphi 0, %s80
      %s83 = sphi 0, %s82
      %s97 = sphi 0, %s83
      %s101 = sphi 0, %s101
      %s103 = sphi 0, %s101
      %s104 = sphi 0, %s103
      %s118 = sphi 0, %s104
      %s122 = sphi 0, %s122
      %s124 = sphi 0, %s122
      %s125 = sphi 0, %s124
      %s139 = sphi 0, %s125
      %s143 = sphi 0, %s143
      %s145 = sphi 0, %s143
      %s146 = sphi 0, %s145
      %s160 = sphi 0, %s146
    $region4: #{tpu_custom_call.1} parent=1 // loop_header_branch
      %23 = sbr.rel (%p21) target = $region8
    $region5: #{tpu_custom_call.1} parent=1 // loop_body
      %s25 = ssub.s32 %s20, 1
      %s26 = ssub.s32 %s20, 2
      %s27 = sadd.s32 %s20, 1
      %s28 = ssub.s32 %s20, %s27
      %p29 = scmp.eq.s32.totalorder %s28, 0
      %s31 = sadd.s32 %s30, 1
      %s32 = scalar_select %p29, %s30, %s31
      %p35 = pneg %p29
      %p36 = scmp.eq.s32.totalorder %s20, 1
      %p37 = por %p35, %p36
      %p38 = scmp.ne.s32.totalorder %s30, %s33
      %p39 = scmp.eq.s32.totalorder %s20, 0
      %p40 = por %p38, %p39
      %p41 = scmp.ne.s32.totalorder %s30, %s33
      %p42 = scmp.eq.s32.totalorder %s25, 1
      %p43 = por %p41, %p42
      %p44 = scmp.ne.s32.totalorder %s33, %s34
      %p45 = scmp.eq.s32.totalorder %s25, 0
      %p46 = por %p44, %p45
      %p47 = scmp.ne.s32.totalorder %s33, %s34
      %p48 = scmp.eq.s32.totalorder %s26, 1
      %p49 = por %p47, %p48
      %p51 = scmp.ne.s32.totalorder %s34, %s50
      %p52 = scmp.eq.s32.totalorder %s26, 0
      %p53 = por %p51, %p52
      %s54 = ssub.s32 %s20, %s27
      %p55 = scmp.eq.s32.totalorder %s54, 0
      %s57 = sadd.s32 %s56, 1
      %s58 = scalar_select %p55, %s56, %s57
      %p61 = pneg %p55
      %p62 = scmp.eq.s32.totalorder %s20, 1
      %p63 = por %p61, %p62
      %p64 = scmp.ne.s32.totalorder %s56, %s59
      %p65 = scmp.eq.s32.totalorder %s20, 0
      %p66 = por %p64, %p65
      %p67 = scmp.ne.s32.totalorder %s56, %s59
      %p68 = scmp.eq.s32.totalorder %s25, 1
      %p69 = por %p67, %p68
      %p70 = scmp.ne.s32.totalorder %s59, %s60
      %p71 = scmp.eq.s32.totalorder %s25, 0
      %p72 = por %p70, %p71
      %p73 = scmp.ne.s32.totalorder %s59, %s60
      %p74 = scmp.eq.s32.totalorder %s26, 1
      %p75 = por %p73, %p74
      %p77 = scmp.ne.s32.totalorder %s60, %s76
      %p78 = scmp.eq.s32.totalorder %s26, 0
      %p79 = por %p77, %p78
      %s81 = sadd.s32 %s80, 1
      %p84 = scmp.eq.s32.totalorder %s20, 1
      %p85 = scmp.ne.s32.totalorder %s80, %s82
      %p86 = scmp.eq.s32.totalorder %s20, 0
      %p87 = por %p85, %p86
      %p88 = scmp.ne.s32.totalorder %s80, %s82
      %p89 = scmp.eq.s32.totalorder %s25, 1
      %p90 = por %p88, %p89
      %p91 = scmp.ne.s32.totalorder %s82, %s83
      %p92 = scmp.eq.s32.totalorder %s25, 0
      %p93 = por %p91, %p92
      %p94 = scmp.ne.s32.totalorder %s82, %s83
      %p95 = scmp.eq.s32.totalorder %s26, 1
      %p96 = por %p94, %p95
      %p98 = scmp.ne.s32.totalorder %s83, %s97
      %p99 = scmp.eq.s32.totalorder %s26, 0
      %p100 = por %p98, %p99
      %s102 = sadd.s32 %s101, 1
      %p105 = scmp.eq.s32.totalorder %s20, 1
      %p106 = scmp.ne.s32.totalorder %s101, %s103
      %p107 = scmp.eq.s32.totalorder %s20, 0
      %p108 = por %p106, %p107
      %p109 = scmp.ne.s32.totalorder %s101, %s103
      %p110 = scmp.eq.s32.totalorder %s25, 1
      %p111 = por %p109, %p110
      %p112 = scmp.ne.s32.totalorder %s103, %s104
      %p113 = scmp.eq.s32.totalorder %s25, 0
      %p114 = por %p112, %p113
      %p115 = scmp.ne.s32.totalorder %s103, %s104
      %p116 = scmp.eq.s32.totalorder %s26, 1
      %p117 = por %p115, %p116
      %p119 = scmp.ne.s32.totalorder %s104, %s118
      %p120 = scmp.eq.s32.totalorder %s26, 0
      %p121 = por %p119, %p120
      %s123 = sadd.s32 %s122, 1
      %p126 = scmp.eq.s32.totalorder %s20, 1
      %p127 = scmp.ne.s32.totalorder %s122, %s124
      %p128 = scmp.eq.s32.totalorder %s20, 0
      %p129 = por %p127, %p128
      %p130 = scmp.ne.s32.totalorder %s122, %s124
      %p131 = scmp.eq.s32.totalorder %s25, 1
      %p132 = por %p130, %p131
      %p133 = scmp.ne.s32.totalorder %s124, %s125
      %p134 = scmp.eq.s32.totalorder %s25, 0
      %p135 = por %p133, %p134
      %p136 = scmp.ne.s32.totalorder %s124, %s125
      %p137 = scmp.eq.s32.totalorder %s26, 1
      %p138 = por %p136, %p137
      %p140 = scmp.ne.s32.totalorder %s125, %s139
      %p141 = scmp.eq.s32.totalorder %s26, 0
      %p142 = por %p140, %p141
      %s144 = sadd.s32 %s143, 1
      %p147 = scmp.eq.s32.totalorder %s20, 1
      %p148 = scmp.ne.s32.totalorder %s143, %s145
      %p149 = scmp.eq.s32.totalorder %s20, 0
      %p150 = por %p148, %p149
      %p151 = scmp.ne.s32.totalorder %s143, %s145
      %p152 = scmp.eq.s32.totalorder %s25, 1
      %p153 = por %p151, %p152
      %p154 = scmp.ne.s32.totalorder %s145, %s146
      %p155 = scmp.eq.s32.totalorder %s25, 0
      %p156 = por %p154, %p155
      %p157 = scmp.ne.s32.totalorder %s145, %s146
      %p158 = scmp.eq.s32.totalorder %s26, 1
      %p159 = por %p157, %p158
      %p161 = scmp.ne.s32.totalorder %s146, %s160
      %p162 = scmp.eq.s32.totalorder %s26, 0
      %p163 = por %p161, %p162
      %p164 = scmp.le.s32.totalorder 1, %s20
      %p165 = scmp.lt.s32.totalorder %s20, 3
      %p166 = pnand %p164, %p165
      %p167 = pneg %p166
      // Predicated region
      $region9: #{tpu_custom_call.1} parent=5 // pred_check
        _
      $region10: #{tpu_custom_call.1} parent=5 // pred_check_branch
        %169 = sbr.rel (%p166) target = $region12
      $region11: #{tpu_custom_call.1} parent=5 // pred_region
        %s170 = ssub.s32 %s20, 1
        // Predicated region
        $region13: #{tpu_custom_call.1} parent=11 // pred_check
          %p171 = pneg %p93
        $region14: #{tpu_custom_call.1} parent=11 // pred_check_branch
          %173 = sbr.rel (%p171) target = $region16
        $region15: #{tpu_custom_call.1} parent=11 // pred_region
          %s175 = ssub.s32 64, 64
          %176 = vsyncadd [#allocation7], %s175
          %s178 = sshll.u32 [#allocation8], 4
          %s179 = int_to_ptr.vmem [resolvable:$true] %s178
          %181 = dma.hbm_to_vmem [thread:$0]  %s2, 64, %s179, [#allocation7]
        $region16: #{tpu_custom_call.1} parent=11 // pred_fallthru
          _
        // Predicated region
        $region17: #{tpu_custom_call.1} parent=11 // pred_check
          %p182 = pneg %p114
        $region18: #{tpu_custom_call.1} parent=11 // pred_check_branch
          %184 = sbr.rel (%p182) target = $region20
        $region19: #{tpu_custom_call.1} parent=11 // pred_region
          %s186 = ssub.s32 64, 64
          %187 = vsyncadd [#allocation10], %s186
          %s189 = sshll.u32 [#allocation9], 4
          %s190 = int_to_ptr.vmem [resolvable:$true] %s189
          %192 = dma.hbm_to_vmem [thread:$0]  %s3, 64, %s190, [#allocation10]
        $region20: #{tpu_custom_call.1} parent=11 // pred_fallthru
          _
        // Predicated region
        $region21: #{tpu_custom_call.1} parent=11 // pred_check
          %p193 = pneg %p135
        $region22: #{tpu_custom_call.1} parent=11 // pred_check_branch
          %195 = sbr.rel (%p193) target = $region24
        $region23: #{tpu_custom_call.1} parent=11 // pred_region
          _
        $region24: #{tpu_custom_call.1} parent=11 // pred_fallthru
          _
      $region12: #{tpu_custom_call.1} parent=5 // pred_fallthru
        _
      %p196 = scmp.lt.s32.totalorder %s20, 2
      // Predicated region
      $region25: #{tpu_custom_call.1} parent=5 // pred_check
        %p197 = pneg %p196
      $region26: #{tpu_custom_call.1} parent=5 // pred_check_branch
        %199 = sbr.rel (%p197) target = $region28
      $region27: #{tpu_custom_call.1} parent=5 // pred_region
        // Predicated region
        $region29: #{tpu_custom_call.1} parent=27 // pred_check
          %p200 = pneg %p40
        $region30: #{tpu_custom_call.1} parent=27 // pred_check_branch
          %202 = sbr.rel (%p200) target = $region32
        $region31: #{tpu_custom_call.1} parent=27 // pred_region
          %s203 = sand.u32 %s30, 1
          %s204 = scalar_lea.sflag [#allocation5], %s203
          %s205 = sand.u32 %s30, 1
          %s206 = smul.addr %s205, 32
          %s207 = scalar_lea.vmem [#allocation4], %s206
          %s208 = smul.u32 4, %s20
          %s210 = ssub.s32 512, 512
          %211 = vsyncadd %s204, %s210
          %s212 = smul.addr %s208, 128
          %s213 = scalar_lea.hbm %s0, %s212
          %s215 = sshll.u32 %s207, 4
          %s216 = int_to_ptr.vmem [resolvable:$true] %s215
          %218 = dma.hbm_to_vmem [thread:$0]  %s213, 512, %s216, %s204
        $region32: #{tpu_custom_call.1} parent=27 // pred_fallthru
          _
        // Predicated region
        $region33: #{tpu_custom_call.1} parent=27 // pred_check
          %p219 = pneg %p66
        $region34: #{tpu_custom_call.1} parent=27 // pred_check_branch
          %221 = sbr.rel (%p219) target = $region36
        $region35: #{tpu_custom_call.1} parent=27 // pred_region
          %s222 = sand.u32 %s20, 1
          %s223 = scalar_lea.sflag [#allocation7], %s222
          %s224 = sand.u32 %s56, 1
          %s225 = smul.addr %s224, 2048
          %s226 = scalar_lea.vmem [#allocation6], %s225
          %s227 = smul.u32 64, %s20
          %s229 = ssub.s32 32768, 32768
          %230 = vsyncadd %s223, %s229
          %s231 = smul.addr %s227, 4
          %s232 = smul.addr %s231, 128
          %s233 = scalar_lea.hbm %s1, %s232
          %s234 = sshll.u32 %s226, 4
          %s235 = int_to_ptr.vmem [resolvable:$true] %s234
          %240 = dma.hbm_to_vmem [thread:$0]  %s233, 32768, %s235, %s223, 512, 512, 32
        $region36: #{tpu_custom_call.1} parent=27 // pred_fallthru
          _
      $region28: #{tpu_custom_call.1} parent=5 // pred_fallthru
        _
      %p241 = scmp.le.s32.totalorder 1, %s20
      %p242 = scmp.lt.s32.totalorder %s20, 3
      %p243 = pnand %p241, %p242
      %p244 = pneg %p243
      // Predicated region
      $region37: #{tpu_custom_call.1} parent=5 // pred_check
        _
      $region38: #{tpu_custom_call.1} parent=5 // pred_check_branch
        %246 = sbr.rel (%p243) target = $region40
      $region39: #{tpu_custom_call.1} parent=5 // pred_region
        %s247 = ssub.s32 %s20, 1
        %s248 = sand.u32 %s33, 1
        %s249 = scalar_lea.sflag [#allocation5], %s248
        %s250 = sand.u32 %s33, 1
        %s251 = smul.addr %s250, 32
        %s252 = scalar_lea.vmem [#allocation4], %s251
        // Predicated region
        $region41: #{tpu_custom_call.1} parent=39 // pred_check
          %p253 = pneg %p46
        $region42: #{tpu_custom_call.1} parent=39 // pred_check_branch
          %255 = sbr.rel (%p253) target = $region44
        $region43: #{tpu_custom_call.1} parent=39 // pred_region
          %256 = dma.done %s249, 512
        $region44: #{tpu_custom_call.1} parent=39 // pred_fallthru
          _
        %s257 = sand.u32 %s25, 1
        %s258 = scalar_lea.sflag [#allocation7], %s257
        %s259 = sand.u32 %s59, 1
        %s260 = smul.addr %s259, 2048
        %s261 = scalar_lea.vmem [#allocation6], %s260
        // Predicated region
        $region45: #{tpu_custom_call.1} parent=39 // pred_check
          %p262 = pneg %p72
        $region46: #{tpu_custom_call.1} parent=39 // pred_check_branch
          %264 = sbr.rel (%p262) target = $region48
        $region47: #{tpu_custom_call.1} parent=39 // pred_region
          %265 = dma.done %s258, 32768
        $region48: #{tpu_custom_call.1} parent=39 // pred_fallthru
          _
        // Predicated region
        $region49: #{tpu_custom_call.1} parent=39 // pred_check
          %p266 = pneg %p93
        $region50: #{tpu_custom_call.1} parent=39 // pred_check_branch
          %268 = sbr.rel (%p266) target = $region52
        $region51: #{tpu_custom_call.1} parent=39 // pred_region
          %269 = dma.done [#allocation7], 64
        $region52: #{tpu_custom_call.1} parent=39 // pred_fallthru
          _
        // Predicated region
        $region53: #{tpu_custom_call.1} parent=39 // pred_check
          %p270 = pneg %p114
        $region54: #{tpu_custom_call.1} parent=39 // pred_check_branch
          %272 = sbr.rel (%p270) target = $region56
        $region55: #{tpu_custom_call.1} parent=39 // pred_region
          %273 = dma.done [#allocation10], 64
        $region56: #{tpu_custom_call.1} parent=39 // pred_fallthru
          _
        %s274 = sand.u32 %s33, 1
        %s275 = scalar_lea.sflag [#allocation5], %s274
        %s276 = sand.u32 %s33, 1
        %s277 = smul.addr %s276, 32
        %s278 = scalar_lea.vmem [#allocation4], %s277
        %p279 = pneg %p46
        %p280 = pneg %p43
        %s281 = sand.u32 %s25, 1
        %s282 = scalar_lea.sflag [#allocation7], %s281
        %s283 = sand.u32 %s59, 1
        %s284 = smul.addr %s283, 2048
        %s285 = scalar_lea.vmem [#allocation6], %s284
        %p286 = pneg %p72
        %p287 = pneg %p69
        %p288 = pneg %p93
        %p289 = pneg %p90
        %p290 = pneg %p114
        %p291 = pneg %p111
        %p292 = pneg %p135
        %p293 = pneg %p132
        %p294 = pneg %p156
        %p295 = pneg %p153
        %s296 = smul.u32 4, %s25
        %s297 = smul.u32 64, %s25
        %p298 = scmp.eq.s32.totalorder %s25, 0
        // Predicated region
        $region57: #{tpu_custom_call.1} parent=39 // pred_check
          %p299 = pneg %p298
        $region58: #{tpu_custom_call.1} parent=39 // pred_check_branch
          %301 = sbr.rel (%p299) target = $region60
        $region59: #{tpu_custom_call.1} parent=39 // pred_region
          %302 = vst [vmem:[#allocation2] sm:$0xff] 0.0
          %303 = vst [vmem:[#allocation2 + $0x8] sm:$0xff] 0.0
          %304 = vst [vmem:[#allocation2 + $0x10] sm:$0xff] 0.0
          %305 = vst [vmem:[#allocation2 + $0x18] sm:$0xff] 0.0
        $region60: #{tpu_custom_call.1} parent=39 // pred_fallthru
          _
        %v306 = vld [vmem:[#allocation2] sm:$0xff]
        %v307 = vld [vmem:[#allocation2 + $0x8] sm:$0xff]
        %v308 = vld [vmem:[#allocation2 + $0x10] sm:$0xff]
        %v309 = vld [vmem:[#allocation2 + $0x18] sm:$0xff]
        %v310 = vld [vmem:[%s252] sm:$0xff]
        %v311 = vld [vmem:[%s252 + $0x8] sm:$0xff]
        %v312 = vld [vmem:[%s252 + $0x10] sm:$0xff]
        %v313 = vld [vmem:[%s252 + $0x18] sm:$0xff]
        %v314 = vld [vmem:[%s261] sm:$0xff]
        %v315 = vld [vmem:[%s261 + $0x8] sm:$0xff]
        %v316 = vld [vmem:[%s261 + $0x10] sm:$0xff]
        %v317 = vld [vmem:[%s261 + $0x18] sm:$0xff]
        %v318 = vld [vmem:[%s261 + $0x20] sm:$0xff]
        %v319 = vld [vmem:[%s261 + $0x28] sm:$0xff]
        %v320 = vld [vmem:[%s261 + $0x30] sm:$0xff]
        %v321 = vld [vmem:[%s261 + $0x38] sm:$0xff]
        %v322 = vld [vmem:[%s261 + $0x40] sm:$0xff]
        %v323 = vld [vmem:[%s261 + $0x48] sm:$0xff]
        %v324 = vld [vmem:[%s261 + $0x50] sm:$0xff]
        %v325 = vld [vmem:[%s261 + $0x58] sm:$0xff]
        %v326 = vld [vmem:[%s261 + $0x60] sm:$0xff]
        %v327 = vld [vmem:[%s261 + $0x68] sm:$0xff]
        %v328 = vld [vmem:[%s261 + $0x70] sm:$0xff]
        %v329 = vld [vmem:[%s261 + $0x78] sm:$0xff]
        %v330 = vld [vmem:[%s261 + $0x80] sm:$0xff]
        %v331 = vld [vmem:[%s261 + $0x88] sm:$0xff]
        %v332 = vld [vmem:[%s261 + $0x90] sm:$0xff]
        %v333 = vld [vmem:[%s261 + $0x98] sm:$0xff]
        %v334 = vld [vmem:[%s261 + $0xa0] sm:$0xff]
        %v335 = vld [vmem:[%s261 + $0xa8] sm:$0xff]
        %v336 = vld [vmem:[%s261 + $0xb0] sm:$0xff]
        %v337 = vld [vmem:[%s261 + $0xb8] sm:$0xff]
        %v338 = vld [vmem:[%s261 + $0xc0] sm:$0xff]
        %v339 = vld [vmem:[%s261 + $0xc8] sm:$0xff]
        %v340 = vld [vmem:[%s261 + $0xd0] sm:$0xff]
        %v341 = vld [vmem:[%s261 + $0xd8] sm:$0xff]
        %v342 = vld [vmem:[%s261 + $0xe0] sm:$0xff]
        %v343 = vld [vmem:[%s261 + $0xe8] sm:$0xff]
        %v344 = vld [vmem:[%s261 + $0xf0] sm:$0xff]
        %v345 = vld [vmem:[%s261 + $0xf8] sm:$0xff]
        %v346 = vld [vmem:[%s261 + $0x100] sm:$0xff]
        %v347 = vld [vmem:[%s261 + $0x108] sm:$0xff]
        %v348 = vld [vmem:[%s261 + $0x110] sm:$0xff]
        %v349 = vld [vmem:[%s261 + $0x118] sm:$0xff]
        %v350 = vld [vmem:[%s261 + $0x120] sm:$0xff]
        %v351 = vld [vmem:[%s261 + $0x128] sm:$0xff]
        %v352 = vld [vmem:[%s261 + $0x130] sm:$0xff]
        %v353 = vld [vmem:[%s261 + $0x138] sm:$0xff]
        %v354 = vld [vmem:[%s261 + $0x140] sm:$0xff]
        %v355 = vld [vmem:[%s261 + $0x148] sm:$0xff]
        %v356 = vld [vmem:[%s261 + $0x150] sm:$0xff]
        %v357 = vld [vmem:[%s261 + $0x158] sm:$0xff]
        %v358 = vld [vmem:[%s261 + $0x160] sm:$0xff]
        %v359 = vld [vmem:[%s261 + $0x168] sm:$0xff]
        %v360 = vld [vmem:[%s261 + $0x170] sm:$0xff]
        %v361 = vld [vmem:[%s261 + $0x178] sm:$0xff]
        %v362 = vld [vmem:[%s261 + $0x180] sm:$0xff]
        %v363 = vld [vmem:[%s261 + $0x188] sm:$0xff]
        %v364 = vld [vmem:[%s261 + $0x190] sm:$0xff]
        %v365 = vld [vmem:[%s261 + $0x198] sm:$0xff]
        %v366 = vld [vmem:[%s261 + $0x1a0] sm:$0xff]
        %v367 = vld [vmem:[%s261 + $0x1a8] sm:$0xff]
        %v368 = vld [vmem:[%s261 + $0x1b0] sm:$0xff]
        %v369 = vld [vmem:[%s261 + $0x1b8] sm:$0xff]
        %v370 = vld [vmem:[%s261 + $0x1c0] sm:$0xff]
        %v371 = vld [vmem:[%s261 + $0x1c8] sm:$0xff]
        %v372 = vld [vmem:[%s261 + $0x1d0] sm:$0xff]
        %v373 = vld [vmem:[%s261 + $0x1d8] sm:$0xff]
        %v374 = vld [vmem:[%s261 + $0x1e0] sm:$0xff]
        %v375 = vld [vmem:[%s261 + $0x1e8] sm:$0xff]
        %v376 = vld [vmem:[%s261 + $0x1f0] sm:$0xff]
        %v377 = vld [vmem:[%s261 + $0x1f8] sm:$0xff]
        %v378 = vld [vmem:[%s261 + $0x200] sm:$0xff]
        %v379 = vld [vmem:[%s261 + $0x208] sm:$0xff]
        %v380 = vld [vmem:[%s261 + $0x210] sm:$0xff]
        %v381 = vld [vmem:[%s261 + $0x218] sm:$0xff]
        %v382 = vld [vmem:[%s261 + $0x220] sm:$0xff]
        %v383 = vld [vmem:[%s261 + $0x228] sm:$0xff]
        %v384 = vld [vmem:[%s261 + $0x230] sm:$0xff]
        %v385 = vld [vmem:[%s261 + $0x238] sm:$0xff]
        %v386 = vld [vmem:[%s261 + $0x240] sm:$0xff]
        %v387 = vld [vmem:[%s261 + $0x248] sm:$0xff]
        %v388 = vld [vmem:[%s261 + $0x250] sm:$0xff]
        %v389 = vld [vmem:[%s261 + $0x258] sm:$0xff]
        %v390 = vld [vmem:[%s261 + $0x260] sm:$0xff]
        %v391 = vld [vmem:[%s261 + $0x268] sm:$0xff]
        %v392 = vld [vmem:[%s261 + $0x270] sm:$0xff]
        %v393 = vld [vmem:[%s261 + $0x278] sm:$0xff]
        %v394 = vld [vmem:[%s261 + $0x280] sm:$0xff]
        %v395 = vld [vmem:[%s261 + $0x288] sm:$0xff]
        %v396 = vld [vmem:[%s261 + $0x290] sm:$0xff]
        %v397 = vld [vmem:[%s261 + $0x298] sm:$0xff]
        %v398 = vld [vmem:[%s261 + $0x2a0] sm:$0xff]
        %v399 = vld [vmem:[%s261 + $0x2a8] sm:$0xff]
        %v400 = vld [vmem:[%s261 + $0x2b0] sm:$0xff]
        %v401 = vld [vmem:[%s261 + $0x2b8] sm:$0xff]
        %v402 = vld [vmem:[%s261 + $0x2c0] sm:$0xff]
        %v403 = vld [vmem:[%s261 + $0x2c8] sm:$0xff]
        %v404 = vld [vmem:[%s261 + $0x2d0] sm:$0xff]
        %v405 = vld [vmem:[%s261 + $0x2d8] sm:$0xff]
        %v406 = vld [vmem:[%s261 + $0x2e0] sm:$0xff]
        %v407 = vld [vmem:[%s261 + $0x2e8] sm:$0xff]
        %v408 = vld [vmem:[%s261 + $0x2f0] sm:$0xff]
        %v409 = vld [vmem:[%s261 + $0x2f8] sm:$0xff]
        %v410 = vld [vmem:[%s261 + $0x300] sm:$0xff]
        %v411 = vld [vmem:[%s261 + $0x308] sm:$0xff]
        %v412 = vld [vmem:[%s261 + $0x310] sm:$0xff]
        %v413 = vld [vmem:[%s261 + $0x318] sm:$0xff]
        %v414 = vld [vmem:[%s261 + $0x320] sm:$0xff]
        %v415 = vld [vmem:[%s261 + $0x328] sm:$0xff]
        %v416 = vld [vmem:[%s261 + $0x330] sm:$0xff]
        %v417 = vld [vmem:[%s261 + $0x338] sm:$0xff]
        %v418 = vld [vmem:[%s261 + $0x340] sm:$0xff]
        %v419 = vld [vmem:[%s261 + $0x348] sm:$0xff]
        %v420 = vld [vmem:[%s261 + $0x350] sm:$0xff]
        %v421 = vld [vmem:[%s261 + $0x358] sm:$0xff]
        %v422 = vld [vmem:[%s261 + $0x360] sm:$0xff]
        %v423 = vld [vmem:[%s261 + $0x368] sm:$0xff]
        %v424 = vld [vmem:[%s261 + $0x370] sm:$0xff]
        %v425 = vld [vmem:[%s261 + $0x378] sm:$0xff]
        %v426 = vld [vmem:[%s261 + $0x380] sm:$0xff]
        %v427 = vld [vmem:[%s261 + $0x388] sm:$0xff]
        %v428 = vld [vmem:[%s261 + $0x390] sm:$0xff]
        %v429 = vld [vmem:[%s261 + $0x398] sm:$0xff]
        %v430 = vld [vmem:[%s261 + $0x3a0] sm:$0xff]
        %v431 = vld [vmem:[%s261 + $0x3a8] sm:$0xff]
        %v432 = vld [vmem:[%s261 + $0x3b0] sm:$0xff]
        %v433 = vld [vmem:[%s261 + $0x3b8] sm:$0xff]
        %v434 = vld [vmem:[%s261 + $0x3c0] sm:$0xff]
        %v435 = vld [vmem:[%s261 + $0x3c8] sm:$0xff]
        %v436 = vld [vmem:[%s261 + $0x3d0] sm:$0xff]
        %v437 = vld [vmem:[%s261 + $0x3d8] sm:$0xff]
        %v438 = vld [vmem:[%s261 + $0x3e0] sm:$0xff]
        %v439 = vld [vmem:[%s261 + $0x3e8] sm:$0xff]
        %v440 = vld [vmem:[%s261 + $0x3f0] sm:$0xff]
        %v441 = vld [vmem:[%s261 + $0x3f8] sm:$0xff]
        %v442 = vld [vmem:[%s261 + $0x400] sm:$0xff]
        %v443 = vld [vmem:[%s261 + $0x408] sm:$0xff]
        %v444 = vld [vmem:[%s261 + $0x410] sm:$0xff]
        %v445 = vld [vmem:[%s261 + $0x418] sm:$0xff]
        %v446 = vld [vmem:[%s261 + $0x420] sm:$0xff]
        %v447 = vld [vmem:[%s261 + $0x428] sm:$0xff]
        %v448 = vld [vmem:[%s261 + $0x430] sm:$0xff]
        %v449 = vld [vmem:[%s261 + $0x438] sm:$0xff]
        %v450 = vld [vmem:[%s261 + $0x440] sm:$0xff]
        %v451 = vld [vmem:[%s261 + $0x448] sm:$0xff]
        %v452 = vld [vmem:[%s261 + $0x450] sm:$0xff]
        %v453 = vld [vmem:[%s261 + $0x458] sm:$0xff]
        %v454 = vld [vmem:[%s261 + $0x460] sm:$0xff]
        %v455 = vld [vmem:[%s261 + $0x468] sm:$0xff]
        %v456 = vld [vmem:[%s261 + $0x470] sm:$0xff]
        %v457 = vld [vmem:[%s261 + $0x478] sm:$0xff]
        %v458 = vld [vmem:[%s261 + $0x480] sm:$0xff]
        %v459 = vld [vmem:[%s261 + $0x488] sm:$0xff]
        %v460 = vld [vmem:[%s261 + $0x490] sm:$0xff]
        %v461 = vld [vmem:[%s261 + $0x498] sm:$0xff]
        %v462 = vld [vmem:[%s261 + $0x4a0] sm:$0xff]
        %v463 = vld [vmem:[%s261 + $0x4a8] sm:$0xff]
        %v464 = vld [vmem:[%s261 + $0x4b0] sm:$0xff]
        %v465 = vld [vmem:[%s261 + $0x4b8] sm:$0xff]
        %v466 = vld [vmem:[%s261 + $0x4c0] sm:$0xff]
        %v467 = vld [vmem:[%s261 + $0x4c8] sm:$0xff]
        %v468 = vld [vmem:[%s261 + $0x4d0] sm:$0xff]
        %v469 = vld [vmem:[%s261 + $0x4d8] sm:$0xff]
        %v470 = vld [vmem:[%s261 + $0x4e0] sm:$0xff]
        %v471 = vld [vmem:[%s261 + $0x4e8] sm:$0xff]
        %v472 = vld [vmem:[%s261 + $0x4f0] sm:$0xff]
        %v473 = vld [vmem:[%s261 + $0x4f8] sm:$0xff]
        %v474 = vld [vmem:[%s261 + $0x500] sm:$0xff]
        %v475 = vld [vmem:[%s261 + $0x508] sm:$0xff]
        %v476 = vld [vmem:[%s261 + $0x510] sm:$0xff]
        %v477 = vld [vmem:[%s261 + $0x518] sm:$0xff]
        %v478 = vld [vmem:[%s261 + $0x520] sm:$0xff]
        %v479 = vld [vmem:[%s261 + $0x528] sm:$0xff]
        %v480 = vld [vmem:[%s261 + $0x530] sm:$0xff]
        %v481 = vld [vmem:[%s261 + $0x538] sm:$0xff]
        %v482 = vld [vmem:[%s261 + $0x540] sm:$0xff]
        %v483 = vld [vmem:[%s261 + $0x548] sm:$0xff]
        %v484 = vld [vmem:[%s261 + $0x550] sm:$0xff]
        %v485 = vld [vmem:[%s261 + $0x558] sm:$0xff]
        %v486 = vld [vmem:[%s261 + $0x560] sm:$0xff]
        %v487 = vld [vmem:[%s261 + $0x568] sm:$0xff]
        %v488 = vld [vmem:[%s261 + $0x570] sm:$0xff]
        %v489 = vld [vmem:[%s261 + $0x578] sm:$0xff]
        %v490 = vld [vmem:[%s261 + $0x580] sm:$0xff]
        %v491 = vld [vmem:[%s261 + $0x588] sm:$0xff]
        %v492 = vld [vmem:[%s261 + $0x590] sm:$0xff]
        %v493 = vld [vmem:[%s261 + $0x598] sm:$0xff]
        %v494 = vld [vmem:[%s261 + $0x5a0] sm:$0xff]
        %v495 = vld [vmem:[%s261 + $0x5a8] sm:$0xff]
        %v496 = vld [vmem:[%s261 + $0x5b0] sm:$0xff]
        %v497 = vld [vmem:[%s261 + $0x5b8] sm:$0xff]
        %v498 = vld [vmem:[%s261 + $0x5c0] sm:$0xff]
        %v499 = vld [vmem:[%s261 + $0x5c8] sm:$0xff]
        %v500 = vld [vmem:[%s261 + $0x5d0] sm:$0xff]
        %v501 = vld [vmem:[%s261 + $0x5d8] sm:$0xff]
        %v502 = vld [vmem:[%s261 + $0x5e0] sm:$0xff]
        %v503 = vld [vmem:[%s261 + $0x5e8] sm:$0xff]
        %v504 = vld [vmem:[%s261 + $0x5f0] sm:$0xff]
        %v505 = vld [vmem:[%s261 + $0x5f8] sm:$0xff]
        %v506 = vld [vmem:[%s261 + $0x600] sm:$0xff]
        %v507 = vld [vmem:[%s261 + $0x608] sm:$0xff]
        %v508 = vld [vmem:[%s261 + $0x610] sm:$0xff]
        %v509 = vld [vmem:[%s261 + $0x618] sm:$0xff]
        %v510 = vld [vmem:[%s261 + $0x620] sm:$0xff]
        %v511 = vld [vmem:[%s261 + $0x628] sm:$0xff]
        %v512 = vld [vmem:[%s261 + $0x630] sm:$0xff]
        %v513 = vld [vmem:[%s261 + $0x638] sm:$0xff]
        %v514 = vld [vmem:[%s261 + $0x640] sm:$0xff]
        %v515 = vld [vmem:[%s261 + $0x648] sm:$0xff]
        %v516 = vld [vmem:[%s261 + $0x650] sm:$0xff]
        %v517 = vld [vmem:[%s261 + $0x658] sm:$0xff]
        %v518 = vld [vmem:[%s261 + $0x660] sm:$0xff]
        %v519 = vld [vmem:[%s261 + $0x668] sm:$0xff]
        %v520 = vld [vmem:[%s261 + $0x670] sm:$0xff]
        %v521 = vld [vmem:[%s261 + $0x678] sm:$0xff]
        %v522 = vld [vmem:[%s261 + $0x680] sm:$0xff]
        %v523 = vld [vmem:[%s261 + $0x688] sm:$0xff]
        %v524 = vld [vmem:[%s261 + $0x690] sm:$0xff]
        %v525 = vld [vmem:[%s261 + $0x698] sm:$0xff]
        %v526 = vld [vmem:[%s261 + $0x6a0] sm:$0xff]
        %v527 = vld [vmem:[%s261 + $0x6a8] sm:$0xff]
        %v528 = vld [vmem:[%s261 + $0x6b0] sm:$0xff]
        %v529 = vld [vmem:[%s261 + $0x6b8] sm:$0xff]
        %v530 = vld [vmem:[%s261 + $0x6c0] sm:$0xff]
        %v531 = vld [vmem:[%s261 + $0x6c8] sm:$0xff]
        %v532 = vld [vmem:[%s261 + $0x6d0] sm:$0xff]
        %v533 = vld [vmem:[%s261 + $0x6d8] sm:$0xff]
        %v534 = vld [vmem:[%s261 + $0x6e0] sm:$0xff]
        %v535 = vld [vmem:[%s261 + $0x6e8] sm:$0xff]
        %v536 = vld [vmem:[%s261 + $0x6f0] sm:$0xff]
        %v537 = vld [vmem:[%s261 + $0x6f8] sm:$0xff]
        %v538 = vld [vmem:[%s261 + $0x700] sm:$0xff]
        %v539 = vld [vmem:[%s261 + $0x708] sm:$0xff]
        %v540 = vld [vmem:[%s261 + $0x710] sm:$0xff]
        %v541 = vld [vmem:[%s261 + $0x718] sm:$0xff]
        %v542 = vld [vmem:[%s261 + $0x720] sm:$0xff]
        %v543 = vld [vmem:[%s261 + $0x728] sm:$0xff]
        %v544 = vld [vmem:[%s261 + $0x730] sm:$0xff]
        %v545 = vld [vmem:[%s261 + $0x738] sm:$0xff]
        %v546 = vld [vmem:[%s261 + $0x740] sm:$0xff]
        %v547 = vld [vmem:[%s261 + $0x748] sm:$0xff]
        %v548 = vld [vmem:[%s261 + $0x750] sm:$0xff]
        %v549 = vld [vmem:[%s261 + $0x758] sm:$0xff]
        %v550 = vld [vmem:[%s261 + $0x760] sm:$0xff]
        %v551 = vld [vmem:[%s261 + $0x768] sm:$0xff]
        %v552 = vld [vmem:[%s261 + $0x770] sm:$0xff]
        %v553 = vld [vmem:[%s261 + $0x778] sm:$0xff]
        %v554 = vld [vmem:[%s261 + $0x780] sm:$0xff]
        %v555 = vld [vmem:[%s261 + $0x788] sm:$0xff]
        %v556 = vld [vmem:[%s261 + $0x790] sm:$0xff]
        %v557 = vld [vmem:[%s261 + $0x798] sm:$0xff]
        %v558 = vld [vmem:[%s261 + $0x7a0] sm:$0xff]
        %v559 = vld [vmem:[%s261 + $0x7a8] sm:$0xff]
        %v560 = vld [vmem:[%s261 + $0x7b0] sm:$0xff]
        %v561 = vld [vmem:[%s261 + $0x7b8] sm:$0xff]
        %v562 = vld [vmem:[%s261 + $0x7c0] sm:$0xff]
        %v563 = vld [vmem:[%s261 + $0x7c8] sm:$0xff]
        %v564 = vld [vmem:[%s261 + $0x7d0] sm:$0xff]
        %v565 = vld [vmem:[%s261 + $0x7d8] sm:$0xff]
        %v566 = vld [vmem:[%s261 + $0x7e0] sm:$0xff]
        %v567 = vld [vmem:[%s261 + $0x7e8] sm:$0xff]
        %v568 = vld [vmem:[%s261 + $0x7f0] sm:$0xff]
        %v569 = vld [vmem:[%s261 + $0x7f8] sm:$0xff]
        %570 = vmatprep.subr.mxu0 %v315
        %571 = vmatpush1.msra.mxu0 %v314
        %572 = vmatprep.subr.mxu0 %v319
        %573 = vmatpush1.msra.mxu0 %v318
        %574 = vmatprep.subr.mxu0 %v323
        %575 = vmatpush1.msra.mxu0 %v322
        %576 = vmatprep.subr.mxu0 %v327
        %577 = vmatpush1.msra.mxu0 %v326
        %578 = vmatprep.subr.mxu0 %v331
        %579 = vmatpush1.msra.mxu0 %v330
        %580 = vmatprep.subr.mxu0 %v335
        %581 = vmatpush1.msra.mxu0 %v334
        %582 = vmatprep.subr.mxu0 %v339
        %583 = vmatpush1.msra.mxu0 %v338
        %584 = vmatprep.subr.mxu0 %v343
        %585 = vmatpush1.msra.mxu0 %v342
        %586 = vmatprep.subr.mxu0 %v347
        %587 = vmatpush1.msra.mxu0 %v346
        %588 = vmatprep.subr.mxu0 %v351
        %589 = vmatpush1.msra.mxu0 %v350
        %590 = vmatprep.subr.mxu0 %v355
        %591 = vmatpush1.msra.mxu0 %v354
        %592 = vmatprep.subr.mxu0 %v359
        %593 = vmatpush1.msra.mxu0 %v358
        %594 = vmatprep.subr.mxu0 %v363
        %595 = vmatpush1.msra.mxu0 %v362
        %596 = vmatprep.subr.mxu0 %v367
        %597 = vmatpush1.msra.mxu0 %v366
        %598 = vmatprep.subr.mxu0 %v371
        %599 = vmatpush1.msra.mxu0 %v370
        %600 = vmatprep.subr.mxu0 %v375
        %601 = vmatpush1.msra.mxu0 %v374
        %602 = vmatprep.subr.mxu0 %v379
        %603 = vmatpush1.msra.mxu0 %v378
        %604 = vmatprep.subr.mxu0 %v383
        %605 = vmatpush1.msra.mxu0 %v382
        %606 = vmatprep.subr.mxu0 %v387
        %607 = vmatpush1.msra.mxu0 %v386
        %608 = vmatprep.subr.mxu0 %v391
        %609 = vmatpush1.msra.mxu0 %v390
        %610 = vmatprep.subr.mxu0 %v395
        %611 = vmatpush1.msra.mxu0 %v394
        %612 = vmatprep.subr.mxu0 %v399
        %613 = vmatpush1.msra.mxu0 %v398
        %614 = vmatprep.subr.mxu0 %v403
        %615 = vmatpush1.msra.mxu0 %v402
        %616 = vmatprep.subr.mxu0 %v407
        %617 = vmatpush1.msra.mxu0 %v406
        %618 = vmatprep.subr.mxu0 %v411
        %619 = vmatpush1.msra.mxu0 %v410
        %620 = vmatprep.subr.mxu0 %v415
        %621 = vmatpush1.msra.mxu0 %v414
        %622 = vmatprep.subr.mxu0 %v419
        %623 = vmatpush1.msra.mxu0 %v418
        %624 = vmatprep.subr.mxu0 %v423
        %625 = vmatpush1.msra.mxu0 %v422
        %626 = vmatprep.subr.mxu0 %v427
        %627 = vmatpush1.msra.mxu0 %v426
        %628 = vmatprep.subr.mxu0 %v431
        %629 = vmatpush1.msra.mxu0 %v430
        %630 = vmatprep.subr.mxu0 %v435
        %631 = vmatpush1.msra.mxu0 %v434
        %632 = vmatprep.subr.mxu0 %v439
        %633 = vmatpush1.msra.mxu0 %v438
        %634 = vmatprep.mubr.f32.mxu0 %v311
        %635 = vmatmul.mubr.f32.gmra.mrb[0].mxu0 %v310
        %v636 = vpop.f32.mrb[0].mxu0
        %v637 = vadd.f32 0.0, %v636
        %v638 = vpop.f32.mrb[0].mxu0
        %v639 = vadd.f32 0.0, %v638
        %640 = vdwg.mxu0
        %641 = vmatprep.subr.mxu0 %v443
        %642 = vmatpush1.msra.mxu0 %v442
        %643 = vmatprep.subr.mxu0 %v447
        %644 = vmatpush1.msra.mxu0 %v446
        %645 = vmatprep.subr.mxu0 %v451
        %646 = vmatpush1.msra.mxu0 %v450
        %647 = vmatprep.subr.mxu0 %v455
        %648 = vmatpush1.msra.mxu0 %v454
        %649 = vmatprep.subr.mxu0 %v459
        %650 = vmatpush1.msra.mxu0 %v458
        %651 = vmatprep.subr.mxu0 %v463
        %652 = vmatpush1.msra.mxu0 %v462
        %653 = vmatprep.subr.mxu0 %v467
        %654 = vmatpush1.msra.mxu0 %v466
        %655 = vmatprep.subr.mxu0 %v471
        %656 = vmatpush1.msra.mxu0 %v470
        %657 = vmatprep.subr.mxu0 %v475
        %658 = vmatpush1.msra.mxu0 %v474
        %659 = vmatprep.subr.mxu0 %v479
        %660 = vmatpush1.msra.mxu0 %v478
        %661 = vmatprep.subr.mxu0 %v483
        %662 = vmatpush1.msra.mxu0 %v482
        %663 = vmatprep.subr.mxu0 %v487
        %664 = vmatpush1.msra.mxu0 %v486
        %665 = vmatprep.subr.mxu0 %v491
        %666 = vmatpush1.msra.mxu0 %v490
        %667 = vmatprep.subr.mxu0 %v495
        %668 = vmatpush1.msra.mxu0 %v494
        %669 = vmatprep.subr.mxu0 %v499
        %670 = vmatpush1.msra.mxu0 %v498
        %671 = vmatprep.subr.mxu0 %v503
        %672 = vmatpush1.msra.mxu0 %v502
        %673 = vmatprep.subr.mxu0 %v507
        %674 = vmatpush1.msra.mxu0 %v506
        %675 = vmatprep.subr.mxu0 %v511
        %676 = vmatpush1.msra.mxu0 %v510
        %677 = vmatprep.subr.mxu0 %v515
        %678 = vmatpush1.msra.mxu0 %v514
        %679 = vmatprep.subr.mxu0 %v519
        %680 = vmatpush1.msra.mxu0 %v518
        %681 = vmatprep.subr.mxu0 %v523
        %682 = vmatpush1.msra.mxu0 %v522
        %683 = vmatprep.subr.mxu0 %v527
        %684 = vmatpush1.msra.mxu0 %v526
        %685 = vmatprep.subr.mxu0 %v531
        %686 = vmatpush1.msra.mxu0 %v530
        %687 = vmatprep.subr.mxu0 %v535
        %688 = vmatpush1.msra.mxu0 %v534
        %689 = vmatprep.subr.mxu0 %v539
        %690 = vmatpush1.msra.mxu0 %v538
        %691 = vmatprep.subr.mxu0 %v543
        %692 = vmatpush1.msra.mxu0 %v542
        %693 = vmatprep.subr.mxu0 %v547
        %694 = vmatpush1.msra.mxu0 %v546
        %695 = vmatprep.subr.mxu0 %v551
        %696 = vmatpush1.msra.mxu0 %v550
        %697 = vmatprep.subr.mxu0 %v555
        %698 = vmatpush1.msra.mxu0 %v554
        %699 = vmatprep.subr.mxu0 %v559
        %700 = vmatpush1.msra.mxu0 %v558
        %701 = vmatprep.subr.mxu0 %v563
        %702 = vmatpush1.msra.mxu0 %v562
        %703 = vmatprep.subr.mxu0 %v567
        %704 = vmatpush1.msra.mxu0 %v566
        %705 = vmatprep.mubr.f32.mxu0 %v313
        %706 = vmatmul.mubr.f32.gmra.mrb[0].mxu0 %v312
        %v707 = vpop.f32.mrb[0].mxu0
        %v708 = vadd.f32 %v637, %v707
        %v709 = vpop.f32.mrb[0].mxu0
        %v710 = vadd.f32 %v639, %v709
        %711 = vdwg.mxu0
        %712 = vmatprep.subr.mxu0 %v317
        %713 = vmatpush1.msra.mxu0 %v316
        %714 = vmatprep.subr.mxu0 %v321
        %715 = vmatpush1.msra.mxu0 %v320
        %716 = vmatprep.subr.mxu0 %v325
        %717 = vmatpush1.msra.mxu0 %v324
        %718 = vmatprep.subr.mxu0 %v329
        %719 = vmatpush1.msra.mxu0 %v328
        %720 = vmatprep.subr.mxu0 %v333
        %721 = vmatpush1.msra.mxu0 %v332
        %722 = vmatprep.subr.mxu0 %v337
        %723 = vmatpush1.msra.mxu0 %v336
        %724 = vmatprep.subr.mxu0 %v341
        %725 = vmatpush1.msra.mxu0 %v340
        %726 = vmatprep.subr.mxu0 %v345
        %727 = vmatpush1.msra.mxu0 %v344
        %728 = vmatprep.subr.mxu0 %v349
        %729 = vmatpush1.msra.mxu0 %v348
        %730 = vmatprep.subr.mxu0 %v353
        %731 = vmatpush1.msra.mxu0 %v352
        %732 = vmatprep.subr.mxu0 %v357
        %733 = vmatpush1.msra.mxu0 %v356
        %734 = vmatprep.subr.mxu0 %v361
        %735 = vmatpush1.msra.mxu0 %v360
        %736 = vmatprep.subr.mxu0 %v365
        %737 = vmatpush1.msra.mxu0 %v364
        %738 = vmatprep.subr.mxu0 %v369
        %739 = vmatpush1.msra.mxu0 %v368
        %740 = vmatprep.subr.mxu0 %v373
        %741 = vmatpush1.msra.mxu0 %v372
        %742 = vmatprep.subr.mxu0 %v377
        %743 = vmatpush1.msra.mxu0 %v376
        %744 = vmatprep.subr.mxu0 %v381
        %745 = vmatpush1.msra.mxu0 %v380
        %746 = vmatprep.subr.mxu0 %v385
        %747 = vmatpush1.msra.mxu0 %v384
        %748 = vmatprep.subr.mxu0 %v389
        %749 = vmatpush1.msra.mxu0 %v388
        %750 = vmatprep.subr.mxu0 %v393
        %751 = vmatpush1.msra.mxu0 %v392
        %752 = vmatprep.subr.mxu0 %v397
        %753 = vmatpush1.msra.mxu0 %v396
        %754 = vmatprep.subr.mxu0 %v401
        %755 = vmatpush1.msra.mxu0 %v400
        %756 = vmatprep.subr.mxu0 %v405
        %757 = vmatpush1.msra.mxu0 %v404
        %758 = vmatprep.subr.mxu0 %v409
        %759 = vmatpush1.msra.mxu0 %v408
        %760 = vmatprep.subr.mxu0 %v413
        %761 = vmatpush1.msra.mxu0 %v412
        %762 = vmatprep.subr.mxu0 %v417
        %763 = vmatpush1.msra.mxu0 %v416
        %764 = vmatprep.subr.mxu0 %v421
        %765 = vmatpush1.msra.mxu0 %v420
        %766 = vmatprep.subr.mxu0 %v425
        %767 = vmatpush1.msra.mxu0 %v424
        %768 = vmatprep.subr.mxu0 %v429
        %769 = vmatpush1.msra.mxu0 %v428
        %770 = vmatprep.subr.mxu0 %v433
        %771 = vmatpush1.msra.mxu0 %v432
        %772 = vmatprep.subr.mxu0 %v437
        %773 = vmatpush1.msra.mxu0 %v436
        %774 = vmatprep.subr.mxu0 %v441
        %775 = vmatpush1.msra.mxu0 %v440
        %776 = vmatprep.mubr.f32.mxu0 %v311
        %777 = vmatmul.mubr.f32.gmra.mrb[0].mxu0 %v310
        %v778 = vpop.f32.mrb[0].mxu0
        %v779 = vadd.f32 0.0, %v778
        %v780 = vpop.f32.mrb[0].mxu0
        %v781 = vadd.f32 0.0, %v780
        %782 = vdwg.mxu0
        %783 = vmatprep.subr.mxu0 %v445
        %784 = vmatpush1.msra.mxu0 %v444
        %785 = vmatprep.subr.mxu0 %v449
        %786 = vmatpush1.msra.mxu0 %v448
        %787 = vmatprep.subr.mxu0 %v453
        %788 = vmatpush1.msra.mxu0 %v452
        %789 = vmatprep.subr.mxu0 %v457
        %790 = vmatpush1.msra.mxu0 %v456
        %791 = vmatprep.subr.mxu0 %v461
        %792 = vmatpush1.msra.mxu0 %v460
        %793 = vmatprep.subr.mxu0 %v465
        %794 = vmatpush1.msra.mxu0 %v464
        %795 = vmatprep.subr.mxu0 %v469
        %796 = vmatpush1.msra.mxu0 %v468
        %797 = vmatprep.subr.mxu0 %v473
        %798 = vmatpush1.msra.mxu0 %v472
        %799 = vmatprep.subr.mxu0 %v477
        %800 = vmatpush1.msra.mxu0 %v476
        %801 = vmatprep.subr.mxu0 %v481
        %802 = vmatpush1.msra.mxu0 %v480
        %803 = vmatprep.subr.mxu0 %v485
        %804 = vmatpush1.msra.mxu0 %v484
        %805 = vmatprep.subr.mxu0 %v489
        %806 = vmatpush1.msra.mxu0 %v488
        %807 = vmatprep.subr.mxu0 %v493
        %808 = vmatpush1.msra.mxu0 %v492
        %809 = vmatprep.subr.mxu0 %v497
        %810 = vmatpush1.msra.mxu0 %v496
        %811 = vmatprep.subr.mxu0 %v501
        %812 = vmatpush1.msra.mxu0 %v500
        %813 = vmatprep.subr.mxu0 %v505
        %814 = vmatpush1.msra.mxu0 %v504
        %815 = vmatprep.subr.mxu0 %v509
        %816 = vmatpush1.msra.mxu0 %v508
        %817 = vmatprep.subr.mxu0 %v513
        %818 = vmatpush1.msra.mxu0 %v512
        %819 = vmatprep.subr.mxu0 %v517
        %820 = vmatpush1.msra.mxu0 %v516
        %821 = vmatprep.subr.mxu0 %v521
        %822 = vmatpush1.msra.mxu0 %v520
        %823 = vmatprep.subr.mxu0 %v525
        %824 = vmatpush1.msra.mxu0 %v524
        %825 = vmatprep.subr.mxu0 %v529
        %826 = vmatpush1.msra.mxu0 %v528
        %827 = vmatprep.subr.mxu0 %v533
        %828 = vmatpush1.msra.mxu0 %v532
        %829 = vmatprep.subr.mxu0 %v537
        %830 = vmatpush1.msra.mxu0 %v536
        %831 = vmatprep.subr.mxu0 %v541
        %832 = vmatpush1.msra.mxu0 %v540
        %833 = vmatprep.subr.mxu0 %v545
        %834 = vmatpush1.msra.mxu0 %v544
        %835 = vmatprep.subr.mxu0 %v549
        %836 = vmatpush1.msra.mxu0 %v548
        %837 = vmatprep.subr.mxu0 %v553
        %838 = vmatpush1.msra.mxu0 %v552
        %839 = vmatprep.subr.mxu0 %v557
        %840 = vmatpush1.msra.mxu0 %v556
        %841 = vmatprep.subr.mxu0 %v561
        %842 = vmatpush1.msra.mxu0 %v560
        %843 = vmatprep.subr.mxu0 %v565
        %844 = vmatpush1.msra.mxu0 %v564
        %845 = vmatprep.subr.mxu0 %v569
        %846 = vmatpush1.msra.mxu0 %v568
        %847 = vmatprep.mubr.f32.mxu0 %v313
        %848 = vmatmul.mubr.f32.gmra.mrb[0].mxu0 %v312
        %v849 = vpop.f32.mrb[0].mxu0
        %v850 = vadd.f32 %v779, %v849
        %v851 = vpop.f32.mrb[0].mxu0
        %v852 = vadd.f32 %v781, %v851
        %853 = vdwg.mxu0
        %v854 = vadd.f32 %v306, %v708
        %v855 = vadd.f32 %v307, %v710
        %v856 = vadd.f32 %v308, %v850
        %v857 = vadd.f32 %v309, %v852
        %858 = vst [vmem:[#allocation2] sm:$0xff] %v854
        %859 = vst [vmem:[#allocation2 + $0x8] sm:$0xff] %v855
        %860 = vst [vmem:[#allocation2 + $0x10] sm:$0xff] %v856
        %861 = vst [vmem:[#allocation2 + $0x18] sm:$0xff] %v857
        %p862 = scmp.eq.s32.totalorder %s25, 1
        // Predicated region
        $region61: #{tpu_custom_call.1} parent=39 // pred_check
          %p863 = pneg %p862
        $region62: #{tpu_custom_call.1} parent=39 // pred_check_branch
          %865 = sbr.rel (%p863) target = $region64
        $region63: #{tpu_custom_call.1} parent=39 // pred_region
          %v866 = vld [vmem:[#allocation2] sm:$0xff]
          %v867 = vld [vmem:[#allocation2 + $0x8] sm:$0xff]
          %v868 = vld [vmem:[#allocation2 + $0x10] sm:$0xff]
          %v869 = vld [vmem:[#allocation2 + $0x18] sm:$0xff]
          %v870 = vld [vmem:[#allocation8] sm:$0xf]
          %v872 = vlaneseq
          %v873 = vshrl.u32 %v872, 7
          %v874 = vsub.s32 0, %v873
          %v875 = vrot.slane %v870, %v874
          %v876 = vlaneseq
          %v877 = vshrl.u32 %v876, 7
          %v878 = vsub.s32 1, %v877
          %v879 = vrot.slane %v870, %v878
          %v880 = vlaneseq
          %v881 = vshrl.u32 %v880, 7
          %v882 = vsub.s32 2, %v881
          %v883 = vrot.slane %v870, %v882
          %v884 = vlaneseq
          %v885 = vshrl.u32 %v884, 7
          %v886 = vsub.s32 3, %v885
          %v887 = vrot.slane %v870, %v886
          %v892 = vadd.f32 %v866, %v875
          %v893 = vadd.f32 %v867, %v879
          %v894 = vadd.f32 %v868, %v883
          %v895 = vadd.f32 %v869, %v887
          %v896 = vmax.f32 %v892, 0.0
          %v897 = vmax.f32 %v893, 0.0
          %v898 = vmax.f32 %v894, 0.0
          %v899 = vmax.f32 %v895, 0.0
          %v900 = vld [vmem:[#allocation9] sm:$0xf]
          %v902 = vlaneseq
          %v903 = vshrl.u32 %v902, 7
          %v904 = vsub.s32 0, %v903
          %v905 = vrot.slane %v900, %v904
          %v906 = vlaneseq
          %v907 = vshrl.u32 %v906, 7
          %v908 = vsub.s32 1, %v907
          %v909 = vrot.slane %v900, %v908
          %v910 = vlaneseq
          %v911 = vshrl.u32 %v910, 7
          %v912 = vsub.s32 2, %v911
          %v913 = vrot.slane %v900, %v912
          %v914 = vlaneseq
          %v915 = vshrl.u32 %v914, 7
          %v916 = vsub.s32 3, %v915
          %v917 = vrot.slane %v900, %v916
          %v922 = vmul.f32 %v896, %v905
          %v923 = vmul.f32 %v897, %v909
          %v924 = vmul.f32 %v898, %v913
          %v925 = vmul.f32 %v899, %v917
          %v926 = vadd.f32 %v922, %v923
          %v927 = vadd.f32 %v926, %v924
          %v928 = vadd.f32 %v927, %v925
          %929 = vadd.xlane.f32.xlu0 %v928
          %v930 = vpop.xlane.xlu0 %929
          %v931 = vld [vmem:[#allocation3] sm:$0x1]
          %v933 = vlaneseq
          %v934 = vshrl.u32 %v933, 7
          %v935 = vsub.s32 0, %v934
          %v936 = vrot.slane %v931, %v935
          %v938 = vadd.f32 %v930, %v936
          %vm939 = vcmask 7168
          %940 = vst.msk [vmem:[%s5] sm:$0xff] %vm939, %v938
        $region64: #{tpu_custom_call.1} parent=39 // pred_fallthru
          _
        // Predicated region
        $region65: #{tpu_custom_call.1} parent=39 // pred_check
          %p941 = pneg %p153
        $region66: #{tpu_custom_call.1} parent=39 // pred_check_branch
          %943 = sbr.rel (%p941) target = $region68
        $region67: #{tpu_custom_call.1} parent=39 // pred_region
          _
        $region68: #{tpu_custom_call.1} parent=39 // pred_fallthru
          _
        // Predicated region
        $region69: #{tpu_custom_call.1} parent=39 // pred_check
          %p944 = pneg %p153
        $region70: #{tpu_custom_call.1} parent=39 // pred_check_branch
          %946 = sbr.rel (%p944) target = $region72
        $region71: #{tpu_custom_call.1} parent=39 // pred_region
          _
        $region72: #{tpu_custom_call.1} parent=39 // pred_fallthru
          _
      $region40: #{tpu_custom_call.1} parent=5 // pred_fallthru
        _
      %p947 = scmp.le.s32.totalorder 2, %s20
      // Predicated region
      $region73: #{tpu_custom_call.1} parent=5 // pred_check
        %p948 = pneg %p947
      $region74: #{tpu_custom_call.1} parent=5 // pred_check_branch
        %950 = sbr.rel (%p948) target = $region76
      $region75: #{tpu_custom_call.1} parent=5 // pred_region
        %s951 = ssub.s32 %s20, 2
      $region76: #{tpu_custom_call.1} parent=5 // pred_fallthru
        _
    $region6: #{tpu_custom_call.1} parent=1 // loop_footer
      %s24 = sadd.s32 1, %s20
    $region7: #{tpu_custom_call.1} parent=1 // loop_footer_branch
      %19 = sbr.rel target = $region3
    $region8: #{tpu_custom_call.1} parent=1 // loop_exit
      _
    %952 = vsyncpa [#allocation5], 1
    %s953 = scalar_lea.sflag [#allocation5], 1
    %954 = vsyncpa %s953, 1
    %955 = vsyncpa [#allocation7], 1
    %s956 = scalar_lea.sflag [#allocation7], 1
    %957 = vsyncpa %s956, 1
    %958 = vsyncpa [#allocation10], 1

</llo_original>
